<compile_context>
chip_gen: v7x
topology: tpu7x:2x2x1
jax: 0.10.0
libtpu: 0.0.40
codegen_flags: <defaults>
</compile_context>

<pallas_src>
import jax
import jax.numpy as jnp
from jax import lax
from jax.experimental import pallas as pl
from jax.experimental.pallas import tpu as pltpu


NUM_SPLITS = 2  # leading 'parallel' grid axis: uses both TensorCores on v7x


def _log_sigmoid(x):
    # numerically stable logsigmoid(x) = min(x, 0) - log1p(exp(-|x|))
    return jnp.minimum(x, 0.0) - jnp.log1p(jnp.exp(-jnp.abs(x)))


def _round_up(x, m):
    return ((x + m - 1) // m) * m


def _make_kernel(m_valid, tm, steps_per_core):
    def kernel(pos_ref, ctx_ref, neg_ref, out_ref, acc_ref):
        c = pl.program_id(0)
        i = pl.program_id(1)

        @pl.when(i == 0)
        def _():
            acc_ref[...] = jnp.zeros_like(acc_ref)

        pos = pos_ref[...]                      # (TM, E)    input dtype
        ctx = ctx_ref[...]                      # (TM, E)
        neg = neg_ref[...]                      # (TM, N, E)

        # Positive logits: multiply in input dtype, reduce over emb in f32.
        pos_logits = jnp.sum(pos * ctx, axis=-1, dtype=jnp.float32,
                             keepdims=True)                        # (TM, 1)
        # Negative logits: negate the reduced (TM, N) result instead of
        # materializing -neg over the full (TM, N, E) tile.
        neg_logits = -jnp.sum(neg * ctx[:, None, :], axis=-1,
                              dtype=jnp.float32)                   # (TM, N)

        per_row = _log_sigmoid(pos_logits) + jnp.sum(
            _log_sigmoid(neg_logits), axis=-1, keepdims=True)      # (TM, 1)

        # Mask rows beyond the real M (partial boundary block / revisited
        # clamped tail blocks contribute zero).
        row0 = (c * steps_per_core + i) * tm
        rows = row0 + lax.broadcasted_iota(jnp.int32, (tm, 1), 0)
        per_row = jnp.where(rows < m_valid, per_row, 0.0)

        # Deferred reduction: cheap VPU add into the vector accumulator.
        acc_ref[...] += per_row

        @pl.when(i == pl.num_programs(1) - 1)
        def _():
            total = -jnp.sum(acc_ref[...])
            out_ref[...] = jnp.full(out_ref.shape, total, dtype=out_ref.dtype)

    return kernel


def negative_sampling_loss(positive_sample, negative_samples, context_tensor,
                           *, vmem_budget_bytes=12 * 1024 * 1024):
    """positive_sample: (S, B, E); negative_samples: (S, B, N, E);
    context_tensor: (S, B, E). Returns scalar f32 loss."""
    S, B, N, E = negative_samples.shape
    M = S * B

    # Flatten rows; negatives stay in their natural (M, N, E) layout
    # (free reshape -- no extra HBM read/write of the largest tensor).
    pos2d = positive_sample.reshape(M, E)
    ctx2d = context_tensor.reshape(M, E)
    neg3d = negative_samples.reshape(M, N, E)

    itemsize = jnp.dtype(positive_sample.dtype).itemsize

    # Row tile: biggest multiple of 8 whose double-buffered streams fit the
    # VMEM budget (sized conservatively for v7x's 64 MiB), capped to one
    # core's share of the rows so tiny inputs don't over-pad.
    bytes_per_row = (N + 2) * E * itemsize      # neg + pos + ctx per row
    tm = vmem_budget_bytes // (2 * bytes_per_row)
    tm = min(tm, 2048, _round_up(pl.cdiv(M, NUM_SPLITS), 8))
    tm = max(8, (tm // 8) * 8)

    n_blocks = pl.cdiv(M, tm)                   # number of valid row blocks
    steps_per_core = pl.cdiv(n_blocks, NUM_SPLITS)
    last_block = n_blocks - 1

    def row_block(c, i):
        # Clamp so redundant tail steps just re-read the last valid block
        # (their rows are >= M and fully masked in the kernel).
        return jnp.minimum(c * steps_per_core + i, last_block)

    kernel = _make_kernel(M, tm, steps_per_core)

    # NOTE: if E < 128 the lane dim is under-utilized; production E >= 128
    # makes the vregs/DMA fully dense.  (Kept simple & correct here.)
    flops = 2 * M * (N + 1) * E
    transcendentals = 2 * M * (N + 1)
    bytes_accessed = itemsize * M * (N + 2) * E + 4 * NUM_SPLITS * 8 * 128

    out = pl.pallas_call(
        kernel,
        out_shape=jax.ShapeDtypeStruct((NUM_SPLITS, 8, 128), jnp.float32),
        grid_spec=pltpu.PrefetchScalarGridSpec(
            num_scalar_prefetch=0,
            grid=(NUM_SPLITS, steps_per_core),
            in_specs=[
                pl.BlockSpec((tm, E), lambda c, i: (row_block(c, i), 0)),
                pl.BlockSpec((tm, E), lambda c, i: (row_block(c, i), 0)),
                pl.BlockSpec((tm, N, E), lambda c, i: (row_block(c, i), 0, 0)),
            ],
            out_specs=pl.BlockSpec((1, 8, 128), lambda c, i: (c, 0, 0)),
            scratch_shapes=[pltpu.VMEM((tm, 1), jnp.float32)],
        ),
        compiler_params=pltpu.CompilerParams(
            dimension_semantics=("parallel", "arbitrary"),
            vmem_limit_bytes=48 * 1024 * 1024,
        ),
        cost_estimate=pl.CostEstimate(
            flops=flops,
            transcendentals=transcendentals,
            bytes_accessed=bytes_accessed,
        ),
    )(pos2d, ctx2d, neg3d)

    # Each core's partial sum is broadcast over its (8, 128) output block.
    return jnp.sum(out[:, 0, 0])


def _reference_loss(positive_sample, negative_samples, context_tensor):
    pos_logits = jnp.sum(positive_sample * context_tensor, axis=-1)
    pos_loss = jax.nn.log_sigmoid(pos_logits)
    neg_logits = jnp.sum(-negative_samples * context_tensor[:, :, None, :], axis=-1)
    neg_loss = jax.nn.log_sigmoid(neg_logits).sum(-1)
    return -(pos_loss + neg_loss).sum()


if __name__ == "__main__":
    seq_len, batch, num_neg, emb = 8, 2, 4, 32
    key = jax.random.PRNGKey(0)
    k1, k2, k3 = jax.random.split(key, 3)
    positive = jax.random.normal(k1, (seq_len, batch, emb), dtype=jnp.float32)
    negatives = jax.random.normal(k2, (seq_len, batch, num_neg, emb), dtype=jnp.float32)
    context = jax.random.normal(k3, (seq_len, batch, emb), dtype=jnp.float32)

    loss = negative_sampling_loss(positive, negatives, context)
    loss = jax.block_until_ready(loss)

    ref = _reference_loss(positive, negatives, context)
    assert jnp.allclose(loss, ref, rtol=1e-5, atol=1e-5), (loss, ref)
    print("KERNEL_OK")
</pallas_src>

<mosaic_0001>
module attributes {stable_mosaic.version = 11 : i64} {
  func.func @kernel(%arg0: i32, %arg1: i32, %arg2: memref<8x32xf32, #tpu.memory_space<vmem>>, %arg3: memref<8x32xf32, #tpu.memory_space<vmem>>, %arg4: memref<8x4x32xf32, #tpu.memory_space<vmem>>, %arg5: memref<1x8x128xf32, #tpu.memory_space<vmem>>, %arg6: memref<8x1xf32, #tpu.memory_space<vmem>>) attributes {dimension_semantics = [#tpu.dimension_semantics<parallel>, #tpu.dimension_semantics<arbitrary>], iteration_bounds = array<i64: 2, 1>, scalar_prefetch = 0 : i64, scratch_operands = 1 : i64, tpu.core_type = #tpu.core_type<tc>, window_params = [{transform_indices = @transform_0, window_bounds = array<i64: 8, 32>}, {transform_indices = @transform_1, window_bounds = array<i64: 8, 32>}, {transform_indices = @transform_2, window_bounds = array<i64: 8, 4, 32>}, {transform_indices = @transform_3, window_bounds = array<i64: 1, 8, 128>}]} {
    %c0_i32 = arith.constant 0 : i32
    %0 = arith.cmpi eq, %arg1, %c0_i32 : i32
    %1 = arith.extui %0 : i1 to i32
    %c0_i32_0 = arith.constant 0 : i32
    %2 = arith.cmpi ne, %1, %c0_i32_0 : i32
    scf.if %2 {
      %cst_21 = arith.constant 0.000000e+00 : f32
      %50 = vector.broadcast %cst_21 : f32 to vector<8x1xf32>
      %c0_22 = arith.constant 0 : index
      %c0_23 = arith.constant 0 : index
      %51 = vector.load %arg6[%c0_22, %c0_23] : memref<8x1xf32, #tpu.memory_space<vmem>>, vector<8x1xf32>
      tpu.vector_store %arg6[%c0_22, %c0_23], %50 {strides = array<i32>} : memref<8x1xf32, #tpu.memory_space<vmem>>, vector<8x1xf32>,
    } else {
    }
    %c0 = arith.constant 0 : index
    %c0_1 = arith.constant 0 : index
    %3 = vector.load %arg2[%c0, %c0_1] : memref<8x32xf32, #tpu.memory_space<vmem>>, vector<8x32xf32>
    %c0_2 = arith.constant 0 : index
    %c0_3 = arith.constant 0 : index
    %4 = vector.load %arg3[%c0_2, %c0_3] : memref<8x32xf32, #tpu.memory_space<vmem>>, vector<8x32xf32>
    %c0_4 = arith.constant 0 : index
    %c0_5 = arith.constant 0 : index
    %c0_6 = arith.constant 0 : index
    %5 = vector.load %arg4[%c0_4, %c0_5, %c0_6] : memref<8x4x32xf32, #tpu.memory_space<vmem>>, vector<8x4x32xf32>
    %6 = arith.mulf %3, %4 : vector<8x32xf32>
    %cst = arith.constant dense<0.000000e+00> : vector<8xf32>
    %7 = vector.multi_reduction <add>, %6, %cst [1] : vector<8x32xf32> to vector<8xf32>
    %8 = vector.shape_cast %7 : vector<8xf32> to vector<8x1xf32>
    %9 = vector.shape_cast %4 : vector<8x32xf32> to vector<8x1x32xf32>
    %10 = vector.broadcast %9 : vector<8x1x32xf32> to vector<8x4x32xf32>
    %11 = arith.mulf %5, %10 : vector<8x4x32xf32>
    %cst_7 = arith.constant dense<0.000000e+00> : vector<8x4xf32>
    %12 = vector.multi_reduction <add>, %11, %cst_7 [2] : vector<8x4x32xf32> to vector<8x4xf32>
    %cst_8 = arith.constant 0.000000e+00 : f32
    %13 = vector.broadcast %cst_8 : f32 to vector<8x4xf32>
    %14 = arith.subf %13, %12 : vector<8x4xf32>
    %cst_9 = arith.constant 0.000000e+00 : f32
    %15 = vector.broadcast %cst_9 : f32 to vector<8x1xf32>
    %16 = arith.minimumf %8, %15 : vector<8x1xf32>
    %17 = math.absf %8 : vector<8x1xf32>
    %cst_10 = arith.constant 0.000000e+00 : f32
    %18 = vector.broadcast %cst_10 : f32 to vector<8x1xf32>
    %19 = arith.subf %18, %17 : vector<8x1xf32>
    %20 = math.exp %19 : vector<8x1xf32>
    %21 = math.log1p %20 : vector<8x1xf32>
    %22 = arith.subf %16, %21 : vector<8x1xf32>
    %cst_11 = arith.constant 0.000000e+00 : f32
    %23 = vector.broadcast %cst_11 : f32 to vector<8x4xf32>
    %24 = arith.minimumf %14, %23 : vector<8x4xf32>
    %25 = math.absf %14 : vector<8x4xf32>
    %cst_12 = arith.constant 0.000000e+00 : f32
    %26 = vector.broadcast %cst_12 : f32 to vector<8x4xf32>
    %27 = arith.subf %26, %25 : vector<8x4xf32>
    %28 = math.exp %27 : vector<8x4xf32>
    %29 = math.log1p %28 : vector<8x4xf32>
    %30 = arith.subf %24, %29 : vector<8x4xf32>
    %cst_13 = arith.constant dense<0.000000e+00> : vector<8xf32>
    %31 = vector.multi_reduction <add>, %30, %cst_13 [1] : vector<8x4xf32> to vector<8xf32>
    %32 = vector.shape_cast %31 : vector<8xf32> to vector<8x1xf32>
    %33 = arith.addf %22, %32 : vector<8x1xf32>
    %c1_i32 = arith.constant 1 : i32
    %34 = arith.muli %arg0, %c1_i32 : i32
    %35 = arith.addi %34, %arg1 : i32
    %c8_i32 = arith.constant 8 : i32
    %36 = arith.muli %35, %c8_i32 : i32
    %37 = tpu.iota {dimensions = array<i32: 0>} : vector<8x1xi32>
    %38 = vector.broadcast %36 : i32 to vector<8x1xi32>
    %39 = arith.addi %38, %37 : vector<8x1xi32>
    %c16_i32 = arith.constant 16 : i32
    %40 = vector.broadcast %c16_i32 : i32 to vector<8x1xi32>
    %41 = arith.cmpi slt, %39, %40 : vector<8x1xi32>
    %cst_14 = arith.constant 0.000000e+00 : f32
    %42 = vector.broadcast %cst_14 : f32 to vector<8x1xf32>
    %43 = arith.select %41, %33, %42 : vector<8x1xi1>, vector<8x1xf32>
    %c0_15 = arith.constant 0 : index
    %c0_16 = arith.constant 0 : index
    %44 = vector.load %arg6[%c0_15, %c0_16] : memref<8x1xf32, #tpu.memory_space<vmem>>, vector<8x1xf32>
    %45 = arith.addf %44, %43 : vector<8x1xf32>
    %c0_17 = arith.constant 0 : index
    %c0_18 = arith.constant 0 : index
    %46 = vector.load %arg6[%c0_17, %c0_18] : memref<8x1xf32, #tpu.memory_space<vmem>>, vector<8x1xf32>
    tpu.vector_store %arg6[%c0_17, %c0_18], %45 {strides = array<i32>} : memref<8x1xf32, #tpu.memory_space<vmem>>, vector<8x1xf32>,
    %c0_i32_19 = arith.constant 0 : i32
    %47 = arith.cmpi eq, %arg1, %c0_i32_19 : i32
    %48 = arith.extui %47 : i1 to i32
    %c0_i32_20 = arith.constant 0 : i32
    %49 = arith.cmpi ne, %48, %c0_i32_20 : i32
    scf.if %49 {
      %c0_21 = arith.constant 0 : index
      %c0_22 = arith.constant 0 : index
      %50 = vector.load %arg6[%c0_21, %c0_22] : memref<8x1xf32, #tpu.memory_space<vmem>>, vector<8x1xf32>
      %51 = vector.shape_cast %50 : vector<8x1xf32> to vector<1x8x1xf32>
      %cst_23 = arith.constant dense<0.000000e+00> : vector<1xf32>
      %52 = vector.multi_reduction <add>, %51, %cst_23 [1, 2] : vector<1x8x1xf32> to vector<1xf32>
      %53 = vector.shape_cast %52 : vector<1xf32> to vector<1x1x1xf32>
      %54 = vector.extract %53[0, 0, 0] : f32 from vector<1x1x1xf32>
      %cst_24 = arith.constant 0.000000e+00 : f32
      %55 = arith.subf %cst_24, %54 : f32
      %56 = vector.broadcast %55 : f32 to vector<1x8x128xf32>
      %c0_25 = arith.constant 0 : index
      %c0_26 = arith.constant 0 : index
      %c0_27 = arith.constant 0 : index
      %57 = vector.load %arg5[%c0_25, %c0_26, %c0_27] : memref<1x8x128xf32, #tpu.memory_space<vmem>>, vector<1x8x128xf32>
      tpu.vector_store %arg5[%c0_25, %c0_26, %c0_27], %56 {strides = array<i32>} : memref<1x8x128xf32, #tpu.memory_space<vmem>>, vector<1x8x128xf32>,
    } else {
    }
    return
  }
  func.func @transform_0(%arg0: i32, %arg1: i32) -> (i32, i32) {
    %c1_i32 = arith.constant 1 : i32
    %0 = arith.muli %arg0, %c1_i32 : i32
    %1 = arith.addi %0, %arg1 : i32
    %c1_i32_0 = arith.constant 1 : i32
    %2 = arith.minsi %1, %c1_i32_0 : i32
    %c0_i32 = arith.constant 0 : i32
    %c0_i32_1 = arith.constant 0 : i32
    return %2, %c0_i32 : i32, i32
  }
  func.func @transform_1(%arg0: i32, %arg1: i32) -> (i32, i32) {
    %c1_i32 = arith.constant 1 : i32
    %0 = arith.muli %arg0, %c1_i32 : i32
    %1 = arith.addi %0, %arg1 : i32
    %c1_i32_0 = arith.constant 1 : i32
    %2 = arith.minsi %1, %c1_i32_0 : i32
    %c0_i32 = arith.constant 0 : i32
    %c0_i32_1 = arith.constant 0 : i32
    return %2, %c0_i32 : i32, i32
  }
  func.func @transform_2(%arg0: i32, %arg1: i32) -> (i32, i32, i32) {
    %c1_i32 = arith.constant 1 : i32
    %0 = arith.muli %arg0, %c1_i32 : i32
    %1 = arith.addi %0, %arg1 : i32
    %c1_i32_0 = arith.constant 1 : i32
    %2 = arith.minsi %1, %c1_i32_0 : i32
    %c0_i32 = arith.constant 0 : i32
    %c0_i32_1 = arith.constant 0 : i32
    %c0_i32_2 = arith.constant 0 : i32
    return %2, %c0_i32, %c0_i32_1 : i32, i32, i32
  }
  func.func @transform_3(%arg0: i32, %arg1: i32) -> (i32, i32, i32) {
    %c0_i32 = arith.constant 0 : i32
    %c0_i32_0 = arith.constant 0 : i32
    %c0_i32_1 = arith.constant 0 : i32
    return %arg0, %c0_i32, %c0_i32_0 : i32, i32, i32
  }
}

</mosaic_0001>

<llo_original>
// kernel: tpu_custom_call.1
$region0: #{tpu_custom_call.1}
  #allocation0 [shape = 'u32[]', space=smem, size = 0x4, offset = 0x4, fixed_abs, tag = 'smem constant byte address 0x4 - core index']
  #allocation1 [shape = 'u32[144,128]{1,0:T(1,128)}', space=vmem, size = 0x12000, scoped, tag = 'internal scratch']
  #allocation2 [shape = 'f32[8,1]{1,0:T(8,128)}', space=vmem, size = 0x1000, scoped, tag = 'scratch operand']
  %s0 = inlined_call_operand.hbm [shape: f32[16,32], index: 0, kind: input, shape index: {}]
  %s1 = inlined_call_operand.hbm [shape: f32[16,32], index: 1, kind: input, shape index: {}]
  %s2 = inlined_call_operand.hbm [shape: f32[16,4,32], index: 2, kind: input, shape index: {}]
  %s3 = inlined_call_operand.hbm [shape: f32[2,8,128], index: 3, kind: output, shape index: {}]
  %s4 = sld [smem:[#allocation0]]
  $region65: #{tpu_custom_call.1} parent=0
    _
  %s6 = ssub.s32 1, %s4
  %s7 = scalar_select 0, %s6, %s4
  $region1: #{tpu_custom_call.1} parent=0
    #allocation3 [shape = 'u8[8192]{0}', space=vmem, size = 0x2000, scoped, tag = 'input window, operand 0']
    #allocation4 [shape = 's32[2]{0}', space=sflag, size = 0x8, scoped, tag = 'scoped memory for tpu_custom_call.1']
    #allocation5 [shape = 's32[2]{0}', space=sflag, size = 0x8, scoped, tag = 'scoped memory for tpu_custom_call.1']
    #allocation6 [shape = 'u8[8192]{0}', space=vmem, size = 0x2000, scoped, tag = 'input window, operand 1']
    #allocation7 [shape = 's32[2]{0}', space=sflag, size = 0x8, scoped, tag = 'scoped memory for tpu_custom_call.1']
    #allocation8 [shape = 'u8[32768]{0}', space=vmem, size = 0x8000, scoped, tag = 'input window, operand 2']
    #allocation9 [shape = 'u8[8192]{0}', space=vmem, size = 0x2000, scoped, tag = 'output window, operand 0']
    %8 = vsyncpa [#allocation4], 0
    %s9 = scalar_lea.sflag [#allocation4], 1
    %10 = vsyncpa %s9, 0
    %11 = vsyncpa [#allocation7], 0
    %s12 = scalar_lea.sflag [#allocation7], 1
    %13 = vsyncpa %s12, 0
    %14 = vsyncpa [#allocation5], 0
    %s15 = scalar_lea.sflag [#allocation5], 1
    %16 = vsyncpa %s15, 0
    loop: start=0, step=1, limit=4
    $region2: #{tpu_custom_call.1} parent=1 // loop_pre_header
      _
    $region3: #{tpu_custom_call.1} parent=1 // loop_header
      %s18 = sphi 0, %s22
      %p19 = scmp.ge.s32.totalorder %s18, 4
      %s25 = sphi 0, %s37
      %s26 = sphi 0, %s33
      %s27 = sphi 0, %s25
      %s28 = sphi 0, %s26
      %s29 = sphi 0, %s27
      %s30 = sphi 0, %s28
      %s46 = sphi 0, %s48
      %s49 = sphi 0, %s46
      %s50 = sphi 0, %s49
      %s66 = sphi 0, %s50
      %s78 = sphi 0, %s80
      %s81 = sphi 0, %s78
      %s82 = sphi 0, %s81
      %s98 = sphi 0, %s82
      %s110 = sphi 0, %s112
      %s113 = sphi 0, %s110
      %s114 = sphi 0, %s113
      %s130 = sphi 0, %s114
      %s136 = sphi 0, %s138
      %s139 = sphi 0, %s136
      %s140 = sphi 0, %s139
      %s156 = sphi 0, %s140
    $region4: #{tpu_custom_call.1} parent=1 // loop_header_branch
      %21 = sbr.rel (%p19) target = $region8
    $region5: #{tpu_custom_call.1} parent=1 // loop_body
      %s23 = ssub.s32 %s18, 1
      %s24 = ssub.s32 %s18, 2
      %s31 = sadd.s32 1, %s26
      %p32 = scmp.ge.s32.totalorder %s31, 1
      %s33 = scalar_select %p32, 0, %s31
      %s34 = sadd.s32 1, %s25
      %s35 = scalar_select %p32, %s34, %s25
      %p36 = scmp.ge.s32.totalorder %s35, 2
      %s37 = scalar_select %p36, 0, %s35
      %s38 = sadd.s32 %s25, %s26
      %p39 = scmp.lt.s32.totalorder %s38, 1
      %s40 = scalar_select %p39, %s38, 1
      %s41 = sadd.s32 %s37, %s33
      %p42 = scmp.lt.s32.totalorder %s41, 1
      %s43 = scalar_select %p42, %s41, 1
      %s44 = ssub.s32 %s40, %s43
      %p45 = scmp.eq.s32.totalorder %s44, 0
      %s47 = sadd.s32 %s46, 1
      %s48 = scalar_select %p45, %s46, %s47
      %p51 = pneg %p45
      %p52 = scmp.eq.s32.totalorder %s18, 1
      %p53 = por %p51, %p52
      %p54 = scmp.ne.s32.totalorder %s46, %s49
      %p55 = scmp.eq.s32.totalorder %s18, 0
      %p56 = por %p54, %p55
      %p57 = scmp.ne.s32.totalorder %s46, %s49
      %p58 = scmp.eq.s32.totalorder %s23, 1
      %p59 = por %p57, %p58
      %p60 = scmp.ne.s32.totalorder %s49, %s50
      %p61 = scmp.eq.s32.totalorder %s23, 0
      %p62 = por %p60, %p61
      %p63 = scmp.ne.s32.totalorder %s49, %s50
      %p64 = scmp.eq.s32.totalorder %s24, 1
      %p65 = por %p63, %p64
      %p67 = scmp.ne.s32.totalorder %s50, %s66
      %p68 = scmp.eq.s32.totalorder %s24, 0
      %p69 = por %p67, %p68
      %s70 = sadd.s32 %s25, %s26
      %p71 = scmp.lt.s32.totalorder %s70, 1
      %s72 = scalar_select %p71, %s70, 1
      %s73 = sadd.s32 %s37, %s33
      %p74 = scmp.lt.s32.totalorder %s73, 1
      %s75 = scalar_select %p74, %s73, 1
      %s76 = ssub.s32 %s72, %s75
      %p77 = scmp.eq.s32.totalorder %s76, 0
      %s79 = sadd.s32 %s78, 1
      %s80 = scalar_select %p77, %s78, %s79
      %p83 = pneg %p77
      %p84 = scmp.eq.s32.totalorder %s18, 1
      %p85 = por %p83, %p84
      %p86 = scmp.ne.s32.totalorder %s78, %s81
      %p87 = scmp.eq.s32.totalorder %s18, 0
      %p88 = por %p86, %p87
      %p89 = scmp.ne.s32.totalorder %s78, %s81
      %p90 = scmp.eq.s32.totalorder %s23, 1
      %p91 = por %p89, %p90
      %p92 = scmp.ne.s32.totalorder %s81, %s82
      %p93 = scmp.eq.s32.totalorder %s23, 0
      %p94 = por %p92, %p93
      %p95 = scmp.ne.s32.totalorder %s81, %s82
      %p96 = scmp.eq.s32.totalorder %s24, 1
      %p97 = por %p95, %p96
      %p99 = scmp.ne.s32.totalorder %s82, %s98
      %p100 = scmp.eq.s32.totalorder %s24, 0
      %p101 = por %p99, %p100
      %s102 = sadd.s32 %s25, %s26
      %p103 = scmp.lt.s32.totalorder %s102, 1
      %s104 = scalar_select %p103, %s102, 1
      %s105 = sadd.s32 %s37, %s33
      %p106 = scmp.lt.s32.totalorder %s105, 1
      %s107 = scalar_select %p106, %s105, 1
      %s108 = ssub.s32 %s104, %s107
      %p109 = scmp.eq.s32.totalorder %s108, 0
      %s111 = sadd.s32 %s110, 1
      %s112 = scalar_select %p109, %s110, %s111
      %p115 = pneg %p109
      %p116 = scmp.eq.s32.totalorder %s18, 1
      %p117 = por %p115, %p116
      %p118 = scmp.ne.s32.totalorder %s110, %s113
      %p119 = scmp.eq.s32.totalorder %s18, 0
      %p120 = por %p118, %p119
      %p121 = scmp.ne.s32.totalorder %s110, %s113
      %p122 = scmp.eq.s32.totalorder %s23, 1
      %p123 = por %p121, %p122
      %p124 = scmp.ne.s32.totalorder %s113, %s114
      %p125 = scmp.eq.s32.totalorder %s23, 0
      %p126 = por %p124, %p125
      %p127 = scmp.ne.s32.totalorder %s113, %s114
      %p128 = scmp.eq.s32.totalorder %s24, 1
      %p129 = por %p127, %p128
      %p131 = scmp.ne.s32.totalorder %s114, %s130
      %p132 = scmp.eq.s32.totalorder %s24, 0
      %p133 = por %p131, %p132
      %s134 = ssub.s32 %s25, %s37
      %p135 = scmp.eq.s32.totalorder %s134, 0
      %s137 = sadd.s32 %s136, 1
      %s138 = scalar_select %p135, %s136, %s137
      %p141 = pneg %p135
      %p142 = scmp.eq.s32.totalorder %s18, 1
      %p143 = por %p141, %p142
      %p144 = scmp.ne.s32.totalorder %s136, %s139
      %p145 = scmp.eq.s32.totalorder %s18, 0
      %p146 = por %p144, %p145
      %p147 = scmp.ne.s32.totalorder %s136, %s139
      %p148 = scmp.eq.s32.totalorder %s23, 1
      %p149 = por %p147, %p148
      %p150 = scmp.ne.s32.totalorder %s139, %s140
      %p151 = scmp.eq.s32.totalorder %s23, 0
      %p152 = por %p150, %p151
      %p153 = scmp.ne.s32.totalorder %s139, %s140
      %p154 = scmp.eq.s32.totalorder %s24, 1
      %p155 = por %p153, %p154
      %p157 = scmp.ne.s32.totalorder %s140, %s156
      %p158 = scmp.eq.s32.totalorder %s24, 0
      %p159 = por %p157, %p158
      %p160 = scmp.le.s32.totalorder 1, %s18
      %p161 = scmp.lt.s32.totalorder %s18, 3
      %p162 = pnand %p160, %p161
      %p163 = pneg %p162
      // Predicated region
      $region9: #{tpu_custom_call.1} parent=5 // pred_check
        _
      $region10: #{tpu_custom_call.1} parent=5 // pred_check_branch
        %165 = sbr.rel (%p162) target = $region12
      $region11: #{tpu_custom_call.1} parent=5 // pred_region
        %s166 = ssub.s32 %s18, 1
      $region12: #{tpu_custom_call.1} parent=5 // pred_fallthru
        _
      %p167 = scmp.lt.s32.totalorder %s18, 2
      // Predicated region
      $region13: #{tpu_custom_call.1} parent=5 // pred_check
        %p168 = pneg %p167
      $region14: #{tpu_custom_call.1} parent=5 // pred_check_branch
        %170 = sbr.rel (%p168) target = $region16
      $region15: #{tpu_custom_call.1} parent=5 // pred_region
        // Predicated region
        $region17: #{tpu_custom_call.1} parent=15 // pred_check
          %p171 = pneg %p56
        $region18: #{tpu_custom_call.1} parent=15 // pred_check_branch
          %173 = sbr.rel (%p171) target = $region20
        $region19: #{tpu_custom_call.1} parent=15 // pred_region
          %s174 = sand.u32 %s46, 1
          %s175 = scalar_lea.sflag [#allocation4], %s174
          %s176 = sand.u32 %s46, 1
          %s177 = smul.addr %s176, 8
          %s178 = scalar_lea.vmem [#allocation3], %s177
          %s179 = sadd.s32 %s25, %s26
          %p180 = scmp.lt.s32.totalorder %s179, 1
          %s181 = scalar_select %p180, %s179, 1
          %s183 = ssub.s32 128, 128
          %184 = vsyncadd %s175, %s183
          %s185 = smul.addr %s181, 128
          %s186 = scalar_lea.hbm %s0, %s185
          %s188 = sshll.u32 %s178, 4
          %s189 = int_to_ptr.vmem [resolvable:$true] %s188
          %191 = dma.hbm_to_vmem [thread:$0]  %s186, 128, %s189, %s175
        $region20: #{tpu_custom_call.1} parent=15 // pred_fallthru
          _
        // Predicated region
        $region21: #{tpu_custom_call.1} parent=15 // pred_check
          %p192 = pneg %p88
        $region22: #{tpu_custom_call.1} parent=15 // pred_check_branch
          %194 = sbr.rel (%p192) target = $region24
        $region23: #{tpu_custom_call.1} parent=15 // pred_region
          %s195 = sand.u32 %s18, 1
          %s196 = scalar_lea.sflag [#allocation7], %s195
          %s197 = sand.u32 %s78, 1
          %s198 = smul.addr %s197, 8
          %s199 = scalar_lea.vmem [#allocation6], %s198
          %s200 = sadd.s32 %s25, %s26
          %p201 = scmp.lt.s32.totalorder %s200, 1
          %s202 = scalar_select %p201, %s200, 1
          %s204 = ssub.s32 128, 128
          %205 = vsyncadd %s196, %s204
          %s206 = smul.addr %s202, 128
          %s207 = scalar_lea.hbm %s1, %s206
          %s209 = sshll.u32 %s199, 4
          %s210 = int_to_ptr.vmem [resolvable:$true] %s209
          %212 = dma.hbm_to_vmem [thread:$0]  %s207, 128, %s210, %s196
        $region24: #{tpu_custom_call.1} parent=15 // pred_fallthru
          _
        // Predicated region
        $region25: #{tpu_custom_call.1} parent=15 // pred_check
          %p213 = pneg %p120
        $region26: #{tpu_custom_call.1} parent=15 // pred_check_branch
          %215 = sbr.rel (%p213) target = $region28
        $region27: #{tpu_custom_call.1} parent=15 // pred_region
          %s216 = sand.u32 %s18, 1
          %s217 = scalar_lea.sflag [#allocation7], %s216
          %s218 = sand.u32 %s110, 1
          %s219 = smul.addr %s218, 32
          %s220 = scalar_lea.vmem [#allocation8], %s219
          %s221 = sadd.s32 %s25, %s26
          %p222 = scmp.lt.s32.totalorder %s221, 1
          %s223 = scalar_select %p222, %s221, 1
          %s224 = smul.u32 8, %s223
          %s226 = ssub.s32 512, 512
          %227 = vsyncadd %s217, %s226
          %s228 = smul.addr %s224, 64
          %s229 = scalar_lea.hbm %s2, %s228
          %s230 = sshll.u32 %s220, 4
          %s231 = int_to_ptr.vmem [resolvable:$true] %s230
          %236 = dma.hbm_to_vmem [thread:$0]  %s229, 512, %s231, %s217, 64, 64, 4
        $region28: #{tpu_custom_call.1} parent=15 // pred_fallthru
          _
      $region16: #{tpu_custom_call.1} parent=5 // pred_fallthru
        _
      %p237 = scmp.le.s32.totalorder 1, %s18
      %p238 = scmp.lt.s32.totalorder %s18, 3
      %p239 = pnand %p237, %p238
      %p240 = pneg %p239
      // Predicated region
      $region29: #{tpu_custom_call.1} parent=5 // pred_check
        _
      $region30: #{tpu_custom_call.1} parent=5 // pred_check_branch
        %242 = sbr.rel (%p239) target = $region32
      $region31: #{tpu_custom_call.1} parent=5 // pred_region
        %s243 = ssub.s32 %s18, 1
        %s244 = sand.u32 %s49, 1
        %s245 = scalar_lea.sflag [#allocation4], %s244
        %s246 = sand.u32 %s49, 1
        %s247 = smul.addr %s246, 8
        %s248 = scalar_lea.vmem [#allocation3], %s247
        // Predicated region
        $region33: #{tpu_custom_call.1} parent=31 // pred_check
          %p249 = pneg %p62
        $region34: #{tpu_custom_call.1} parent=31 // pred_check_branch
          %251 = sbr.rel (%p249) target = $region36
        $region35: #{tpu_custom_call.1} parent=31 // pred_region
          %252 = dma.done %s245, 128
        $region36: #{tpu_custom_call.1} parent=31 // pred_fallthru
          _
        %s253 = sand.u32 %s23, 1
        %s254 = scalar_lea.sflag [#allocation7], %s253
        %s255 = sand.u32 %s81, 1
        %s256 = smul.addr %s255, 8
        %s257 = scalar_lea.vmem [#allocation6], %s256
        // Predicated region
        $region37: #{tpu_custom_call.1} parent=31 // pred_check
          %p258 = pneg %p94
        $region38: #{tpu_custom_call.1} parent=31 // pred_check_branch
          %260 = sbr.rel (%p258) target = $region40
        $region39: #{tpu_custom_call.1} parent=31 // pred_region
          %261 = dma.done %s254, 128
        $region40: #{tpu_custom_call.1} parent=31 // pred_fallthru
          _
        %s262 = sand.u32 %s23, 1
        %s263 = scalar_lea.sflag [#allocation7], %s262
        %s264 = sand.u32 %s113, 1
        %s265 = smul.addr %s264, 32
        %s266 = scalar_lea.vmem [#allocation8], %s265
        // Predicated region
        $region41: #{tpu_custom_call.1} parent=31 // pred_check
          %p267 = pneg %p126
        $region42: #{tpu_custom_call.1} parent=31 // pred_check_branch
          %269 = sbr.rel (%p267) target = $region44
        $region43: #{tpu_custom_call.1} parent=31 // pred_region
          %270 = dma.done %s263, 512
        $region44: #{tpu_custom_call.1} parent=31 // pred_fallthru
          _
        %s271 = sand.u32 %s49, 1
        %s272 = scalar_lea.sflag [#allocation4], %s271
        %s273 = sand.u32 %s49, 1
        %s274 = smul.addr %s273, 8
        %s275 = scalar_lea.vmem [#allocation3], %s274
        %p276 = pneg %p62
        %p277 = pneg %p59
        %s278 = sand.u32 %s23, 1
        %s279 = scalar_lea.sflag [#allocation7], %s278
        %s280 = sand.u32 %s81, 1
        %s281 = smul.addr %s280, 8
        %s282 = scalar_lea.vmem [#allocation6], %s281
        %p283 = pneg %p94
        %p284 = pneg %p91
        %s285 = sand.u32 %s23, 1
        %s286 = scalar_lea.sflag [#allocation7], %s285
        %s287 = sand.u32 %s113, 1
        %s288 = smul.addr %s287, 32
        %s289 = scalar_lea.vmem [#allocation8], %s288
        %p290 = pneg %p126
        %p291 = pneg %p123
        %p292 = pneg %p152
        %p293 = pneg %p149
        %s294 = sand.u32 %s139, 1
        %s295 = scalar_lea.sflag [#allocation5], %s294
        %s296 = sand.u32 %s139, 1
        %s297 = smul.addr %s296, 8
        %s298 = scalar_lea.vmem [#allocation9], %s297
        %s299 = sadd.s32 %s27, %s28
        %p300 = scmp.lt.s32.totalorder %s299, 1
        %s301 = scalar_select %p300, %s299, 1
        %s302 = sadd.s32 %s27, %s28
        %p303 = scmp.lt.s32.totalorder %s302, 1
        %s304 = scalar_select %p303, %s302, 1
        %s305 = sadd.s32 %s27, %s28
        %p306 = scmp.lt.s32.totalorder %s305, 1
        %s307 = scalar_select %p306, %s305, 1
        %s308 = smul.u32 8, %s307
        %p309 = scmp.eq.s32.totalorder %s28, 0
        // Predicated region
        $region45: #{tpu_custom_call.1} parent=31 // pred_check
          %p310 = pneg %p309
        $region46: #{tpu_custom_call.1} parent=31 // pred_check_branch
          %312 = sbr.rel (%p310) target = $region48
        $region47: #{tpu_custom_call.1} parent=31 // pred_region
          %vm313 = vcmask 7168
          %314 = vst.msk [vmem:[#allocation2] sm:$0xff] %vm313, 0.0
        $region48: #{tpu_custom_call.1} parent=31 // pred_fallthru
          _
        %v315 = vld [vmem:[%s248] sm:$0xff]
        %v316 = vld [vmem:[%s257] sm:$0xff]
        %v317 = vld [vmem:[%s266] sm:$0xf]
        %v318 = vld [vmem:[%s266 + $0x4] sm:$0xf]
        %v319 = vld [vmem:[%s266 + $0x8] sm:$0xf]
        %v320 = vld [vmem:[%s266 + $0xc] sm:$0xf]
        %v321 = vld [vmem:[%s266 + $0x10] sm:$0xf]
        %v322 = vld [vmem:[%s266 + $0x14] sm:$0xf]
        %v323 = vld [vmem:[%s266 + $0x18] sm:$0xf]
        %v324 = vld [vmem:[%s266 + $0x1c] sm:$0xf]
        %v325 = vmul.f32 %v315, %v316
        %vm326 = vcmask 261120
        %v327 = vsel %vm326, %v325, 0.0
        %328 = vadd.xlane.f32.xlu0 %v327
        %v329 = vpop.xlane.xlu0 %328
        %v331 = vcombine.high %v316, %v316
        %v333 = vunpack.c.l.s4 1966171168
        %v334 = vunpack.c.0.s8 %v333
        %v335 = vlaneseq
        %v336 = vshrl.u32 %v335, 7
        %v337 = vsub.s32 %v334, %v336
        %v338 = vrot.slane %v316, %v337
        %v340 = vunpack.c.l.s4 1966171168
        %v341 = vunpack.c.0.s8 %v340
        %v342 = vlaneseq
        %v343 = vshrl.u32 %v342, 7
        %v344 = vsub.s32 %v341, %v343
        %v345 = vrot.slane %v331, %v344
        %v346 = vcombine.high %v338, %v338
        %v347 = vcombine.high %v345, %v345
        %v349 = vunpack.c.l.s4 1966171168
        %v350 = vunpack.c.0.s8 %v349
        %v351 = vlaneseq
        %v352 = vshrl.u32 %v351, 7
        %v353 = vsub.s32 %v350, %v352
        %v354 = vrot.slane %v338, %v353
        %v356 = vunpack.c.l.s4 1966171168
        %v357 = vunpack.c.0.s8 %v356
        %v358 = vlaneseq
        %v359 = vshrl.u32 %v358, 7
        %v360 = vsub.s32 %v357, %v359
        %v361 = vrot.slane %v345, %v360
        %v363 = vunpack.c.l.s4 1966171168
        %v364 = vunpack.c.0.s8 %v363
        %v365 = vlaneseq
        %v366 = vshrl.u32 %v365, 7
        %v367 = vsub.s32 %v364, %v366
        %v368 = vrot.slane %v346, %v367
        %v370 = vunpack.c.l.s4 1966171168
        %v371 = vunpack.c.0.s8 %v370
        %v372 = vlaneseq
        %v373 = vshrl.u32 %v372, 7
        %v374 = vsub.s32 %v371, %v373
        %v375 = vrot.slane %v347, %v374
        %v376 = vcombine.high %v354, %v354
        %v377 = vcombine.high %v361, %v361
        %v378 = vcombine.high %v368, %v368
        %v379 = vcombine.high %v375, %v375
        %v380 = vlaneseq
        %v381 = vshrl.u32 %v380, 7
        %v382 = vsub.s32 0, %v381
        %v383 = vrot.slane %v354, %v382
        %v384 = vlaneseq
        %v385 = vshrl.u32 %v384, 7
        %v386 = vsub.s32 0, %v385
        %v387 = vrot.slane %v368, %v386
        %v388 = vlaneseq
        %v389 = vshrl.u32 %v388, 7
        %v390 = vsub.s32 0, %v389
        %v391 = vrot.slane %v376, %v390
        %v392 = vlaneseq
        %v393 = vshrl.u32 %v392, 7
        %v394 = vsub.s32 0, %v393
        %v395 = vrot.slane %v378, %v394
        %v396 = vlaneseq
        %v397 = vshrl.u32 %v396, 7
        %v398 = vsub.s32 0, %v397
        %v399 = vrot.slane %v361, %v398
        %v400 = vlaneseq
        %v401 = vshrl.u32 %v400, 7
        %v402 = vsub.s32 0, %v401
        %v403 = vrot.slane %v375, %v402
        %v404 = vlaneseq
        %v405 = vshrl.u32 %v404, 7
        %v406 = vsub.s32 0, %v405
        %v407 = vrot.slane %v377, %v406
        %v408 = vlaneseq
        %v409 = vshrl.u32 %v408, 7
        %v410 = vsub.s32 0, %v409
        %v411 = vrot.slane %v379, %v410
        %v420 = vmul.f32 %v317, %v383
        %v421 = vmul.f32 %v318, %v387
        %v422 = vmul.f32 %v319, %v391
        %v423 = vmul.f32 %v320, %v395
        %v424 = vmul.f32 %v321, %v399
        %v425 = vmul.f32 %v322, %v403
        %v426 = vmul.f32 %v323, %v407
        %v427 = vmul.f32 %v324, %v411
        %vm428 = vcmask 257024
        %v429 = vsel %vm428, %v420, 0.0
        %430 = vadd.xlane.f32.xlu0 %v429
        %v431 = vpop.xlane.xlu0 %430
        %v432 = vsel %vm428, %v421, 0.0
        %433 = vadd.xlane.f32.xlu0 %v432
        %v434 = vpop.xlane.xlu0 %433
        %v435 = vsel %vm428, %v422, 0.0
        %436 = vadd.xlane.f32.xlu0 %v435
        %v437 = vpop.xlane.xlu0 %436
        %v438 = vsel %vm428, %v423, 0.0
        %439 = vadd.xlane.f32.xlu0 %v438
        %v440 = vpop.xlane.xlu0 %439
        %v441 = vsel %vm428, %v424, 0.0
        %442 = vadd.xlane.f32.xlu0 %v441
        %v443 = vpop.xlane.xlu0 %442
        %v444 = vsel %vm428, %v425, 0.0
        %445 = vadd.xlane.f32.xlu0 %v444
        %v446 = vpop.xlane.xlu0 %445
        %v447 = vsel %vm428, %v426, 0.0
        %448 = vadd.xlane.f32.xlu0 %v447
        %v449 = vpop.xlane.xlu0 %448
        %v450 = vsel %vm428, %v427, 0.0
        %451 = vadd.xlane.f32.xlu0 %v450
        %v452 = vpop.xlane.xlu0 %451
        %v453 = vsub.f32 0.0, %v431
        %v454 = vsub.f32 0.0, %v434
        %v455 = vsub.f32 0.0, %v437
        %v456 = vsub.f32 0.0, %v440
        %v457 = vsub.f32 0.0, %v443
        %v458 = vsub.f32 0.0, %v446
        %v459 = vsub.f32 0.0, %v449
        %v460 = vsub.f32 0.0, %v452
        %v461 = vmin.f32 %v329, 0.0
        %v462 = vand.u32 2147483647, %v329
        %v463 = vsub.f32 0.0, %v462
        %v464 = vmul.f32 %v463, 1.442695
        %v465 = vpow.pop %v464
        %v466 = vadd.f32 %v465, 1.0
        %v467 = vlog2.pop %v466
        %v468 = vmul.f32 %v467, 0.6931472
        %v469 = vmul.f32 -0.5, %v465
        %v470 = vadd.f32 %v469, 1.0
        %v471 = vmul.f32 %v470, %v465
        %v472 = vand.u32 2147483647, %v465
        %vm473 = vcmp.lt.f32.partialorder %v472, 0.0004427343
        %v474 = vsel %vm473, %v471, %v468
        %v475 = vsub.f32 %v461, %v474
        %v476 = vmin.f32 %v453, 0.0
        %v477 = vmin.f32 %v454, 0.0
        %v478 = vmin.f32 %v455, 0.0
        %v479 = vmin.f32 %v456, 0.0
        %v480 = vmin.f32 %v457, 0.0
        %v481 = vmin.f32 %v458, 0.0
        %v482 = vmin.f32 %v459, 0.0
        %v483 = vmin.f32 %v460, 0.0
        %v484 = vand.u32 2147483647, %v453
        %v485 = vand.u32 2147483647, %v454
        %v486 = vand.u32 2147483647, %v455
        %v487 = vand.u32 2147483647, %v456
        %v488 = vand.u32 2147483647, %v457
        %v489 = vand.u32 2147483647, %v458
        %v490 = vand.u32 2147483647, %v459
        %v491 = vand.u32 2147483647, %v460
        %v492 = vsub.f32 0.0, %v484
        %v493 = vsub.f32 0.0, %v485
        %v494 = vsub.f32 0.0, %v486
        %v495 = vsub.f32 0.0, %v487
        %v496 = vsub.f32 0.0, %v488
        %v497 = vsub.f32 0.0, %v489
        %v498 = vsub.f32 0.0, %v490
        %v499 = vsub.f32 0.0, %v491
        %v500 = vmul.f32 %v492, 1.442695
        %v501 = vpow.pop %v500
        %v502 = vmul.f32 %v493, 1.442695
        %v503 = vpow.pop %v502
        %v504 = vmul.f32 %v494, 1.442695
        %v505 = vpow.pop %v504
        %v506 = vmul.f32 %v495, 1.442695
        %v507 = vpow.pop %v506
        %v508 = vmul.f32 %v496, 1.442695
        %v509 = vpow.pop %v508
        %v510 = vmul.f32 %v497, 1.442695
        %v511 = vpow.pop %v510
        %v512 = vmul.f32 %v498, 1.442695
        %v513 = vpow.pop %v512
        %v514 = vmul.f32 %v499, 1.442695
        %v515 = vpow.pop %v514
        %v516 = vadd.f32 %v501, 1.0
        %v517 = vlog2.pop %v516
        %v518 = vmul.f32 %v517, 0.6931472
        %v519 = vmul.f32 -0.5, %v501
        %v520 = vadd.f32 %v519, 1.0
        %v521 = vmul.f32 %v520, %v501
        %v522 = vand.u32 2147483647, %v501
        %vm523 = vcmp.lt.f32.partialorder %v522, 0.0004427343
        %v524 = vsel %vm523, %v521, %v518
        %v525 = vadd.f32 %v503, 1.0
        %v526 = vlog2.pop %v525
        %v527 = vmul.f32 %v526, 0.6931472
        %v528 = vmul.f32 -0.5, %v503
        %v529 = vadd.f32 %v528, 1.0
        %v530 = vmul.f32 %v529, %v503
        %v531 = vand.u32 2147483647, %v503
        %vm532 = vcmp.lt.f32.partialorder %v531, 0.0004427343
        %v533 = vsel %vm532, %v530, %v527
        %v534 = vadd.f32 %v505, 1.0
        %v535 = vlog2.pop %v534
        %v536 = vmul.f32 %v535, 0.6931472
        %v537 = vmul.f32 -0.5, %v505
        %v538 = vadd.f32 %v537, 1.0
        %v539 = vmul.f32 %v538, %v505
        %v540 = vand.u32 2147483647, %v505
        %vm541 = vcmp.lt.f32.partialorder %v540, 0.0004427343
        %v542 = vsel %vm541, %v539, %v536
        %v543 = vadd.f32 %v507, 1.0
        %v544 = vlog2.pop %v543
        %v545 = vmul.f32 %v544, 0.6931472
        %v546 = vmul.f32 -0.5, %v507
        %v547 = vadd.f32 %v546, 1.0
        %v548 = vmul.f32 %v547, %v507
        %v549 = vand.u32 2147483647, %v507
        %vm550 = vcmp.lt.f32.partialorder %v549, 0.0004427343
        %v551 = vsel %vm550, %v548, %v545
        %v552 = vadd.f32 %v509, 1.0
        %v553 = vlog2.pop %v552
        %v554 = vmul.f32 %v553, 0.6931472
        %v555 = vmul.f32 -0.5, %v509
        %v556 = vadd.f32 %v555, 1.0
        %v557 = vmul.f32 %v556, %v509
        %v558 = vand.u32 2147483647, %v509
        %vm559 = vcmp.lt.f32.partialorder %v558, 0.0004427343
        %v560 = vsel %vm559, %v557, %v554
        %v561 = vadd.f32 %v511, 1.0
        %v562 = vlog2.pop %v561
        %v563 = vmul.f32 %v562, 0.6931472
        %v564 = vmul.f32 -0.5, %v511
        %v565 = vadd.f32 %v564, 1.0
        %v566 = vmul.f32 %v565, %v511
        %v567 = vand.u32 2147483647, %v511
        %vm568 = vcmp.lt.f32.partialorder %v567, 0.0004427343
        %v569 = vsel %vm568, %v566, %v563
        %v570 = vadd.f32 %v513, 1.0
        %v571 = vlog2.pop %v570
        %v572 = vmul.f32 %v571, 0.6931472
        %v573 = vmul.f32 -0.5, %v513
        %v574 = vadd.f32 %v573, 1.0
        %v575 = vmul.f32 %v574, %v513
        %v576 = vand.u32 2147483647, %v513
        %vm577 = vcmp.lt.f32.partialorder %v576, 0.0004427343
        %v578 = vsel %vm577, %v575, %v572
        %v579 = vadd.f32 %v515, 1.0
        %v580 = vlog2.pop %v579
        %v581 = vmul.f32 %v580, 0.6931472
        %v582 = vmul.f32 -0.5, %v515
        %v583 = vadd.f32 %v582, 1.0
        %v584 = vmul.f32 %v583, %v515
        %v585 = vand.u32 2147483647, %v515
        %vm586 = vcmp.lt.f32.partialorder %v585, 0.0004427343
        %v587 = vsel %vm586, %v584, %v581
        %v588 = vsub.f32 %v476, %v524
        %v589 = vsub.f32 %v477, %v533
        %v590 = vsub.f32 %v478, %v542
        %v591 = vsub.f32 %v479, %v551
        %v592 = vsub.f32 %v480, %v560
        %v593 = vsub.f32 %v481, %v569
        %v594 = vsub.f32 %v482, %v578
        %v595 = vsub.f32 %v483, %v587
        %v604 = vlaneseq
        %v605 = vand.u32 %v604, 127
        %v606 = vlaneseq
        %v607 = vshrl.u32 %v606, 7
        %v608 = vsub.s32 %v605, %v607
        %v609 = vrot.slane %v588, %v608
        %v610 = vlaneseq
        %v611 = vshrl.u32 %v610, 7
        %v612 = vsub.s32 %v605, %v611
        %v613 = vrot.slane %v589, %v612
        %v614 = vlaneseq
        %v615 = vshrl.u32 %v614, 7
        %v616 = vsub.s32 %v605, %v615
        %v617 = vrot.slane %v590, %v616
        %v618 = vlaneseq
        %v619 = vshrl.u32 %v618, 7
        %v620 = vsub.s32 %v605, %v619
        %v621 = vrot.slane %v591, %v620
        %v622 = vlaneseq
        %v623 = vshrl.u32 %v622, 7
        %v624 = vsub.s32 %v605, %v623
        %v625 = vrot.slane %v592, %v624
        %v626 = vlaneseq
        %v627 = vshrl.u32 %v626, 7
        %v628 = vsub.s32 %v605, %v627
        %v629 = vrot.slane %v593, %v628
        %v630 = vlaneseq
        %v631 = vshrl.u32 %v630, 7
        %v632 = vsub.s32 %v605, %v631
        %v633 = vrot.slane %v594, %v632
        %v634 = vlaneseq
        %v635 = vshrl.u32 %v634, 7
        %v636 = vsub.s32 %v605, %v635
        %v637 = vrot.slane %v595, %v636
        %vm638 = vcmask 1041409
        %v639 = vsel %vm638, %v613, %v609
        %vm640 = vcmask 1042434
        %v641 = vsel %vm640, %v617, %v639
        %vm642 = vcmask 1043459
        %v643 = vsel %vm642, %v621, %v641
        %vm644 = vcmask 1044484
        %v645 = vsel %vm644, %v625, %v643
        %vm646 = vcmask 1045509
        %v647 = vsel %vm646, %v629, %v645
        %vm648 = vcmask 1046534
        %v649 = vsel %vm648, %v633, %v647
        %vm650 = vcmask 1047559
        %v651 = vsel %vm650, %v637, %v649
        %vm653 = vcmask 31744
        %v654 = vsel %vm653, %v651, 0.0
        %655 = vadd.xlane.f32.xlu0 %v654
        %v656 = vpop.xlane.xlu0 %655
        %v657 = vadd.f32 %v475, %v656
        %s658 = sadd.s32 %s27, %s28
        %s659 = smul.u32 %s658, 8
        %v660 = vlaneseq
        %v661 = vshrl.u32 %v660, 7
        %v662 = vstv %s659
        %v663 = vadd.s32 %v662, %v661
        %vm664 = vcmp.lt.s32.totalorder %v663, 16
        %v665 = vsel %vm664, %v657, 0.0
        %v666 = vld [vmem:[#allocation2] sm:$0xff]
        %v667 = vadd.f32 %v666, %v665
        %vm668 = vcmask 7168
        %669 = vst.msk [vmem:[#allocation2] sm:$0xff] %vm668, %v667
        // Predicated region
        $region49: #{tpu_custom_call.1} parent=31 // pred_check
          %p670 = pneg %p309
        $region50: #{tpu_custom_call.1} parent=31 // pred_check_branch
          %672 = sbr.rel (%p670) target = $region52
        $region51: #{tpu_custom_call.1} parent=31 // pred_region
          %v673 = vld [vmem:[#allocation2] sm:$0xff]
          %v674 = vsel %vm668, %v673, 0.0
          %675 = vadd.xlane.f32.xlu0 %v674
          %v676 = vpop.xlane.xlu0 %675
          %v677 = vrot.slane %v676, 4
          %v678 = vadd.f32 %v676, %v677
          %v679 = vrot.slane %v678, 2
          %v680 = vadd.f32 %v678, %v679
          %v681 = vrot.slane %v680, 1
          %v682 = vadd.f32 %v680, %v681
          %s683 = vtos %v682
          %s684 = ssub.f32 0.0, %s683
          %v685 = vstv %s684
          %686 = vst [vmem:[%s298] sm:$0xff] %v685
        $region52: #{tpu_custom_call.1} parent=31 // pred_fallthru
          _
        %s687 = sand.u32 %s139, 1
        %s688 = scalar_lea.sflag [#allocation5], %s687
        %s689 = sand.u32 %s139, 1
        %s690 = smul.addr %s689, 8
        %s691 = scalar_lea.vmem [#allocation9], %s690
        // Predicated region
        $region53: #{tpu_custom_call.1} parent=31 // pred_check
          %p692 = pneg %p149
        $region54: #{tpu_custom_call.1} parent=31 // pred_check_branch
          %694 = sbr.rel (%p692) target = $region56
        $region55: #{tpu_custom_call.1} parent=31 // pred_region
          %s696 = ssub.s32 128, 128
          %697 = vsyncadd %s688, %s696
          %s698 = smul.addr %s27, 128
          %s699 = scalar_lea.hbm %s3, %s698
          %s701 = sshll.u32 %s691, 4
          %s702 = int_to_ptr.vmem [resolvable:$true] %s701
          %704 = dma.vmem_to_hbm [thread:$0]  %s702, 128, %s699, %s688
        $region56: #{tpu_custom_call.1} parent=31 // pred_fallthru
          _
      $region32: #{tpu_custom_call.1} parent=5 // pred_fallthru
        _
      %p705 = scmp.le.s32.totalorder 2, %s18
      // Predicated region
      $region57: #{tpu_custom_call.1} parent=5 // pred_check
        %p706 = pneg %p705
      $region58: #{tpu_custom_call.1} parent=5 // pred_check_branch
        %708 = sbr.rel (%p706) target = $region60
      $region59: #{tpu_custom_call.1} parent=5 // pred_region
        %s709 = ssub.s32 %s18, 2
        // Predicated region
        $region61: #{tpu_custom_call.1} parent=59 // pred_check
          %p710 = pneg %p155
        $region62: #{tpu_custom_call.1} parent=59 // pred_check_branch
          %712 = sbr.rel (%p710) target = $region64
        $region63: #{tpu_custom_call.1} parent=59 // pred_region
          %s713 = sand.u32 %s140, 1
          %s714 = scalar_lea.sflag [#allocation5], %s713
          %s715 = sand.u32 %s140, 1
          %s716 = smul.addr %s715, 8
          %s717 = scalar_lea.vmem [#allocation9], %s716
          %718 = dma.done %s714, 128
        $region64: #{tpu_custom_call.1} parent=59 // pred_fallthru
          _
      $region60: #{tpu_custom_call.1} parent=5 // pred_fallthru
        _
    $region6: #{tpu_custom_call.1} parent=1 // loop_footer
      %s22 = sadd.s32 1, %s18
    $region7: #{tpu_custom_call.1} parent=1 // loop_footer_branch
      %17 = sbr.rel target = $region3
    $region8: #{tpu_custom_call.1} parent=1 // loop_exit
      _
    %719 = vsyncpa [#allocation4], 1
    %s720 = scalar_lea.sflag [#allocation4], 1
    %721 = vsyncpa %s720, 1
    %722 = vsyncpa [#allocation7], 1
    %s723 = scalar_lea.sflag [#allocation7], 1
    %724 = vsyncpa %s723, 1
    %725 = vsyncpa [#allocation5], 1
    %s726 = scalar_lea.sflag [#allocation5], 1
    %727 = vsyncpa %s726, 1

</llo_original>
